<compile_context>
chip_gen: v7x
topology: tpu7x:2x2x1
jax: 0.10.0
libtpu: 0.0.40
codegen_flags: <defaults>
</compile_context>

<pallas_src>
import functools

import jax
import jax.numpy as jnp
from jax import lax
from jax.experimental import pallas as pl
from jax.experimental.pallas import tpu as pltpu

ALPHA = 5e-5
BETA = 0.75
LRN_SIZE = 3
LRN_K = 1.0


def _exit3_part1_kernel(xw_ref, w_ref, b_ref, o_ref, *, TH, W, WO, KH):
    RC = 2 * TH + 1                                     # conv rows feeding TH pooled rows
    xw = xw_ref[0]                                      # (RC+KH-1, W, CG) bf16, cols = even|odd
    CG = xw.shape[-1]

    # ---- fused im2col over kh (leading-dim slices are free) + ONE deep bf16 MXU matmul ----
    patch = jnp.concatenate([xw[kh:kh + RC] for kh in range(KH)], axis=-1)   # (RC, W, KH*CG)
    y = jnp.dot(patch.reshape(RC * W, KH * CG), w_ref[...],
                preferred_element_type=jnp.float32)                          # (RC*W, Cout) f32
    y = y + b_ref[...]                                  # exact f32 bias add
    # ---- ReLU ----
    y = jnp.maximum(y, 0.0)
    # ---- LocalResponseNorm(size=3, alpha=5e-5, beta=0.75, k=1): lane shifts, no extra matmul ----
    sq = y * y
    C = y.shape[-1]
    z = jnp.zeros_like(sq[:, :1])
    s = (sq
         + jnp.concatenate([z, sq[:, :C - 1]], axis=-1)    # channel c-1 (0 at boundary)
         + jnp.concatenate([sq[:, 1:], z], axis=-1))        # channel c+1 (0 at boundary)
    denom = LRN_K + (ALPHA / LRN_SIZE) * s               # >= 1
    inv = lax.rsqrt(denom)
    y = y * (inv * jnp.sqrt(inv))                        # denom ** -0.75 via EUP rsqrt/sqrt
    # ---- MaxPool2d(kernel_size=3, stride=2) ----
    y = y.reshape(RC, W, C)
    yh = y[:RC - 1].reshape(TH, 2, W, C)                 # leading-dim regroup only (free)
    if TH > 1:
        r2 = jnp.concatenate([yh[1:, 0], y[RC - 1:RC]], axis=0)   # conv rows 2,4,...,2*TH
    else:
        r2 = y[RC - 1:RC]
    hp = jnp.maximum(jnp.maximum(yh[:, 0], yh[:, 1]), r2)         # (TH, W, C) row-pooled
    ev = hp[:, :W // 2]                                   # conv cols 0,2,4,... (wrapper permuted)
    od = hp[:, W // 2:]                                   # conv cols 1,3,5,...
    out = jnp.maximum(jnp.maximum(ev[:, :WO], od[:, :WO]), ev[:, 1:WO + 1])   # (TH, WO, C)
    o_ref[0] = out.astype(o_ref.dtype)


def net_exit3_part1(x_nchw, conv_w, conv_b, *, tile_rows=8):
    N, Cin, H, W = x_nchw.shape
    Cout, _, KH, KW = conv_w.shape
    pad = 2
    HO = (H - 3) // 2 + 1
    WO = (W - 3) // 2 + 1
    assert W % 2 == 0, "vectorized max-pool assumes an even input width"
    assert H >= 3 and W >= 4

    CG = Cin * KW + 1                     # 15 (kw, cin) taps + 1 zero lane = 16 lanes per pixel
    TH = max(1, min(tile_rows, HO))       # pooled output rows per grid step
    n_tiles = (HO + TH - 1) // TH
    RC = 2 * TH + 1                       # conv rows per tile (incl. 1-row pool halo)
    RX = RC + KH - 1                      # padded-image rows per tile (conv halo)

    # ---- wrapper: memory-only prep (no conv FLOPs, ~16x less HBM than full im2col) ----
    x_nhwc = jnp.transpose(x_nchw, (0, 2, 3, 1)).astype(jnp.bfloat16)
    x_pad = jnp.pad(x_nhwc, ((0, 0), (pad, pad), (pad, pad), (0, 0)))         # (N, H+4, W+4, Cin)
    groups = [x_pad[:, :, kw:kw + W, :] for kw in range(KW)]                  # kw-shifted copies
    groups.append(jnp.zeros((N, H + 2 * pad, W, 1), jnp.bfloat16))            # zero lane (weight row is 0)
    xw = jnp.concatenate(groups, axis=-1)                                     # (N, H+4, W, CG)
    # permute W columns to (even | odd) so the in-kernel pool is slice-only
    perm = jnp.concatenate([jnp.arange(0, W, 2), jnp.arange(1, W, 2)])
    xw = xw[:, :, perm, :]
    # duplicate the small per-tile row halo in HBM so all BlockSpecs stay plain-blocked
    row_idx = jnp.minimum(
        2 * TH * jnp.arange(n_tiles)[:, None] + jnp.arange(RX)[None, :],
        H + 2 * pad - 1)                                                      # (n_tiles, RX)
    xw_t = xw[:, row_idx].reshape(N * n_tiles, RX, W, CG)

    # conv weight -> (KH*CG, Cout) bf16, rows ordered (kh, kw, cin) to match the patch slab
    w_mat = jnp.transpose(conv_w, (2, 3, 1, 0)).reshape(KH, KW * Cin, Cout)
    w_mat = jnp.pad(w_mat, ((0, 0), (0, CG - KW * Cin), (0, 0)))
    w_mat = w_mat.reshape(KH * CG, Cout).astype(jnp.bfloat16)
    b_row = conv_b.reshape(1, Cout).astype(jnp.float32)

    kernel = functools.partial(_exit3_part1_kernel, TH=TH, W=W, WO=WO, KH=KH)
    out_t = pl.pallas_call(
        kernel,
        out_shape=jax.ShapeDtypeStruct((N * n_tiles, TH, WO, Cout), jnp.float32),
        grid_spec=pltpu.PrefetchScalarGridSpec(
            num_scalar_prefetch=0,
            grid=(N * n_tiles,),
            in_specs=[
                pl.BlockSpec((1, RX, W, CG), lambda t: (t, 0, 0, 0)),
                pl.BlockSpec((KH * CG, Cout), lambda t: (0, 0)),
                pl.BlockSpec((1, Cout), lambda t: (0, 0)),
            ],
            out_specs=pl.BlockSpec((1, TH, WO, Cout), lambda t: (t, 0, 0, 0)),
        ),
        compiler_params=pltpu.CompilerParams(
            dimension_semantics=("parallel",),      # row tiles shard across v7x's 2 TCs
            vmem_limit_bytes=32 * 1024 * 1024,      # >= every generation's default scoped limit
        ),
    )(xw_t, w_mat, b_row)

    out = out_t.reshape(N, n_tiles * TH, WO, Cout)[:, :HO]   # drop last-tile overhang rows
    return jnp.transpose(out, (0, 3, 1, 2))                  # NHWC -> NCHW


def _reference(x, w, b):
    """Pure f32 JAX reference matching the PyTorch module (NCHW)."""
    y = lax.conv_general_dilated(
        x, w, window_strides=(1, 1), padding=((2, 2), (2, 2)),
        dimension_numbers=("NCHW", "OIHW", "NCHW"), precision=lax.Precision.HIGHEST)
    y = y + b.reshape(1, -1, 1, 1)
    y = jnp.maximum(y, 0.0)
    sq = y * y
    sq_pad = jnp.pad(sq, ((0, 0), (1, 1), (0, 0), (0, 0)))
    s = sq_pad[:, 0:-2] + sq_pad[:, 1:-1] + sq_pad[:, 2:]
    y = y / (LRN_K + (ALPHA / LRN_SIZE) * s) ** BETA
    y = lax.reduce_window(y, -jnp.inf, lax.max, (1, 1, 3, 3), (1, 1, 2, 2), "VALID")
    return y


if __name__ == "__main__":
    key = jax.random.PRNGKey(0)
    k1, k2, k3 = jax.random.split(key, 3)
    N, Cin, H, W = 2, 3, 16, 16
    Cout, KH, KW = 64, 5, 5

    x = jax.random.normal(k1, (N, Cin, H, W), dtype=jnp.float32)
    conv_w = 0.1 * jax.random.normal(k2, (Cout, Cin, KH, KW), dtype=jnp.float32)
    conv_b = 0.1 * jax.random.normal(k3, (Cout,), dtype=jnp.float32)

    # tile_rows=4 -> 2 row tiles per image (exercises the halo/overhang path); grid = (4,)
    out = net_exit3_part1(x, conv_w, conv_b, tile_rows=4)
    out = jax.block_until_ready(out)

    ref = _reference(x, conv_w, conv_b)
    assert out.shape == (N, Cout, 7, 7), out.shape
    # bf16 matmul operands with f32 accumulation -> ~1e-3-level differences vs the f32 reference
    if not jnp.allclose(out, ref, atol=2e-2, rtol=1e-2):
        raise AssertionError(
            f"mismatch, max abs err {float(jnp.max(jnp.abs(out - ref)))}")
    print("KERNEL_OK")
</pallas_src>

<mosaic_0001>
module attributes {stable_mosaic.version = 11 : i64} {
  func.func @_exit3_part1_kernel(%arg0: i32, %arg1: memref<1x13x16x16xbf16, #tpu.memory_space<vmem>>, %arg2: memref<80x64xbf16, #tpu.memory_space<vmem>>, %arg3: memref<1x64xf32, #tpu.memory_space<vmem>>, %arg4: memref<1x4x7x64xf32, #tpu.memory_space<vmem>>) attributes {dimension_semantics = [#tpu.dimension_semantics<parallel>], iteration_bounds = array<i64: 4>, scalar_prefetch = 0 : i64, scratch_operands = 0 : i64, tpu.core_type = #tpu.core_type<tc>, window_params = [{transform_indices = @transform_0, window_bounds = array<i64: 1, 13, 16, 16>}, {pipeline_mode = #tpu.pipeline_mode<synchronous>, transform_indices = @transform_1, window_bounds = array<i64: 80, 64>}, {pipeline_mode = #tpu.pipeline_mode<synchronous>, transform_indices = @transform_2, window_bounds = array<i64: 1, 64>}, {transform_indices = @transform_3, window_bounds = array<i64: 1, 4, 7, 64>}]} {
    %c0 = arith.constant 0 : index
    %c0_0 = arith.constant 0 : index
    %c0_1 = arith.constant 0 : index
    %c0_2 = arith.constant 0 : index
    %0 = vector.load %arg1[%c0, %c0_0, %c0_1, %c0_2] : memref<1x13x16x16xbf16, #tpu.memory_space<vmem>>, vector<1x13x16x16xbf16>
    %1 = vector.shape_cast %0 : vector<1x13x16x16xbf16> to vector<13x16x16xbf16>
    %2 = vector.extract_strided_slice %1 {offsets = [0, 0, 0], sizes = [9, 16, 16], strides = [1, 1, 1]} : vector<13x16x16xbf16> to vector<9x16x16xbf16>
    %3 = vector.extract_strided_slice %1 {offsets = [1, 0, 0], sizes = [9, 16, 16], strides = [1, 1, 1]} : vector<13x16x16xbf16> to vector<9x16x16xbf16>
    %4 = vector.extract_strided_slice %1 {offsets = [2, 0, 0], sizes = [9, 16, 16], strides = [1, 1, 1]} : vector<13x16x16xbf16> to vector<9x16x16xbf16>
    %5 = vector.extract_strided_slice %1 {offsets = [3, 0, 0], sizes = [9, 16, 16], strides = [1, 1, 1]} : vector<13x16x16xbf16> to vector<9x16x16xbf16>
    %6 = vector.extract_strided_slice %1 {offsets = [4, 0, 0], sizes = [9, 16, 16], strides = [1, 1, 1]} : vector<13x16x16xbf16> to vector<9x16x16xbf16>
    %7 = tpu.concatenate %2, %3, %4, %5, %6 in 2 : vector<9x16x16xbf16>, vector<9x16x16xbf16>, vector<9x16x16xbf16>, vector<9x16x16xbf16>, vector<9x16x16xbf16> -> vector<9x16x80xbf16>
    %8 = vector.shape_cast %7 : vector<9x16x80xbf16> to vector<144x80xbf16>
    %c0_3 = arith.constant 0 : index
    %c0_4 = arith.constant 0 : index
    %9 = vector.load %arg2[%c0_3, %c0_4] : memref<80x64xbf16, #tpu.memory_space<vmem>>, vector<80x64xbf16>
    %cst = arith.constant dense<0.000000e+00> : vector<144x64xf32>
    %10 = tpu.matmul %8, %9, %cst {dimension_numbers = #tpu.dot_dimension_numbers<[1], [0], [0], [1], [0, 0, 1, 1], [], []>} : vector<144x80xbf16>, vector<80x64xbf16>, vector<144x64xf32> -> vector<144x64xf32>
    %c0_5 = arith.constant 0 : index
    %c0_6 = arith.constant 0 : index
    %11 = vector.load %arg3[%c0_5, %c0_6] : memref<1x64xf32, #tpu.memory_space<vmem>>, vector<1x64xf32>
    %12 = vector.broadcast %11 : vector<1x64xf32> to vector<144x64xf32>
    %13 = arith.addf %10, %12 : vector<144x64xf32>
    %cst_7 = arith.constant 0.000000e+00 : f32
    %14 = vector.broadcast %cst_7 : f32 to vector<144x64xf32>
    %15 = arith.maximumf %13, %14 : vector<144x64xf32>
    %16 = arith.mulf %15, %15 : vector<144x64xf32>
    %cst_8 = arith.constant 0.000000e+00 : f32
    %17 = vector.broadcast %cst_8 : f32 to vector<144x1xf32>
    %18 = vector.extract_strided_slice %16 {offsets = [0, 0], sizes = [144, 63], strides = [1, 1]} : vector<144x64xf32> to vector<144x63xf32>
    %19 = tpu.concatenate %17, %18 in 1 : vector<144x1xf32>, vector<144x63xf32> -> vector<144x64xf32>
    %20 = arith.addf %16, %19 : vector<144x64xf32>
    %21 = vector.extract_strided_slice %16 {offsets = [0, 1], sizes = [144, 63], strides = [1, 1]} : vector<144x64xf32> to vector<144x63xf32>
    %22 = tpu.concatenate %21, %17 in 1 : vector<144x63xf32>, vector<144x1xf32> -> vector<144x64xf32>
    %23 = arith.addf %20, %22 : vector<144x64xf32>
    %cst_9 = arith.constant 1.66666669E-5 : f32
    %24 = vector.broadcast %cst_9 : f32 to vector<144x64xf32>
    %25 = arith.mulf %24, %23 : vector<144x64xf32>
    %cst_10 = arith.constant 1.000000e+00 : f32
    %26 = vector.broadcast %cst_10 : f32 to vector<144x64xf32>
    %27 = arith.addf %26, %25 : vector<144x64xf32>
    %28 = math.rsqrt %27 : vector<144x64xf32>
    %29 = math.sqrt %28 : vector<144x64xf32>
    %30 = arith.mulf %28, %29 : vector<144x64xf32>
    %31 = arith.mulf %15, %30 : vector<144x64xf32>
    %32 = vector.shape_cast %31 : vector<144x64xf32> to vector<9x16x64xf32>
    %33 = vector.extract_strided_slice %32 {offsets = [0, 0, 0], sizes = [8, 16, 64], strides = [1, 1, 1]} : vector<9x16x64xf32> to vector<8x16x64xf32>
    %34 = vector.shape_cast %33 : vector<8x16x64xf32> to vector<4x2x16x64xf32>
    %35 = vector.extract_strided_slice %34 {offsets = [1, 0, 0, 0], sizes = [3, 1, 16, 64], strides = [1, 1, 1, 1]} : vector<4x2x16x64xf32> to vector<3x1x16x64xf32>
    %36 = vector.shape_cast %35 : vector<3x1x16x64xf32> to vector<3x16x64xf32>
    %37 = vector.extract_strided_slice %32 {offsets = [8, 0, 0], sizes = [1, 16, 64], strides = [1, 1, 1]} : vector<9x16x64xf32> to vector<1x16x64xf32>
    %38 = tpu.concatenate %36, %37 in 0 : vector<3x16x64xf32>, vector<1x16x64xf32> -> vector<4x16x64xf32>
    %39 = vector.extract_strided_slice %34 {offsets = [0, 0, 0, 0], sizes = [4, 1, 16, 64], strides = [1, 1, 1, 1]} : vector<4x2x16x64xf32> to vector<4x1x16x64xf32>
    %40 = vector.shape_cast %39 : vector<4x1x16x64xf32> to vector<4x16x64xf32>
    %41 = vector.extract_strided_slice %34 {offsets = [0, 1, 0, 0], sizes = [4, 1, 16, 64], strides = [1, 1, 1, 1]} : vector<4x2x16x64xf32> to vector<4x1x16x64xf32>
    %42 = vector.shape_cast %41 : vector<4x1x16x64xf32> to vector<4x16x64xf32>
    %43 = arith.maximumf %40, %42 : vector<4x16x64xf32>
    %44 = arith.maximumf %43, %38 : vector<4x16x64xf32>
    %45 = vector.extract_strided_slice %44 {offsets = [0, 0, 0], sizes = [4, 8, 64], strides = [1, 1, 1]} : vector<4x16x64xf32> to vector<4x8x64xf32>
    %46 = vector.extract_strided_slice %44 {offsets = [0, 8, 0], sizes = [4, 8, 64], strides = [1, 1, 1]} : vector<4x16x64xf32> to vector<4x8x64xf32>
    %47 = vector.extract_strided_slice %45 {offsets = [0, 0, 0], sizes = [4, 7, 64], strides = [1, 1, 1]} : vector<4x8x64xf32> to vector<4x7x64xf32>
    %48 = vector.extract_strided_slice %46 {offsets = [0, 0, 0], sizes = [4, 7, 64], strides = [1, 1, 1]} : vector<4x8x64xf32> to vector<4x7x64xf32>
    %49 = arith.maximumf %47, %48 : vector<4x7x64xf32>
    %50 = vector.extract_strided_slice %45 {offsets = [0, 1, 0], sizes = [4, 7, 64], strides = [1, 1, 1]} : vector<4x8x64xf32> to vector<4x7x64xf32>
    %51 = arith.maximumf %49, %50 : vector<4x7x64xf32>
    %c0_11 = arith.constant 0 : index
    %c0_12 = arith.constant 0 : index
    %c0_13 = arith.constant 0 : index
    %c0_14 = arith.constant 0 : index
    %52 = vector.load %arg4[%c0_11, %c0_12, %c0_13, %c0_14] : memref<1x4x7x64xf32, #tpu.memory_space<vmem>>, vector<1x4x7x64xf32>
    %53 = vector.shape_cast %52 : vector<1x4x7x64xf32> to vector<4x7x64xf32>
    %54 = vector.shape_cast %51 : vector<4x7x64xf32> to vector<1x4x7x64xf32>
    tpu.vector_store %arg4[%c0_11, %c0_12, %c0_13, %c0_14], %54 {strides = array<i32>} : memref<1x4x7x64xf32, #tpu.memory_space<vmem>>, vector<1x4x7x64xf32>,
    return
  }
  func.func @transform_0(%arg0: i32) -> (i32, i32, i32, i32) {
    %c0_i32 = arith.constant 0 : i32
    %c0_i32_0 = arith.constant 0 : i32
    %c0_i32_1 = arith.constant 0 : i32
    %c0_i32_2 = arith.constant 0 : i32
    return %arg0, %c0_i32, %c0_i32_0, %c0_i32_1 : i32, i32, i32, i32
  }
  func.func @transform_1(%arg0: i32) -> (i32, i32) {
    %c0_i32 = arith.constant 0 : i32
    %c0_i32_0 = arith.constant 0 : i32
    %c0_i32_1 = arith.constant 0 : i32
    return %c0_i32, %c0_i32_0 : i32, i32
  }
  func.func @transform_2(%arg0: i32) -> (i32, i32) {
    %c0_i32 = arith.constant 0 : i32
    %c0_i32_0 = arith.constant 0 : i32
    %c0_i32_1 = arith.constant 0 : i32
    return %c0_i32, %c0_i32_0 : i32, i32
  }
  func.func @transform_3(%arg0: i32) -> (i32, i32, i32, i32) {
    %c0_i32 = arith.constant 0 : i32
    %c0_i32_0 = arith.constant 0 : i32
    %c0_i32_1 = arith.constant 0 : i32
    %c0_i32_2 = arith.constant 0 : i32
    return %arg0, %c0_i32, %c0_i32_0, %c0_i32_1 : i32, i32, i32, i32
  }
}

</mosaic_0001>

<llo_original>
// kernel: tpu_custom_call.1
$region0: #{tpu_custom_call.1}
  #allocation0 [shape = 'u32[]', space=smem, size = 0x4, offset = 0x4, fixed_abs, tag = 'smem constant byte address 0x4 - core index']
  #allocation1 [shape = 'u32[144,128]{1,0:T(1,128)}', space=vmem, size = 0x12000, scoped, tag = 'internal scratch']
  %s0 = inlined_call_operand.hbm [shape: bf16[4,13,16,16], index: 0, kind: input, shape index: {}]
  %s1 = inlined_call_operand.vmem [shape: bf16[80,64], index: 1, kind: input, shape index: {}]
  %s2 = inlined_call_operand.vmem [shape: f32[1,64], index: 2, kind: input, shape index: {}]
  %s3 = inlined_call_operand.vmem [shape: f32[4,4,7,64], index: 3, kind: output, shape index: {}]
  %s4 = sld [smem:[#allocation0]]
  $region49: #{tpu_custom_call.1} parent=0
    _
  %s6 = ssub.s32 1, %s4
  %s7 = scalar_select 0, %s6, %s4
  $region1: #{tpu_custom_call.1} parent=0
    #allocation2 [shape = 'u8[106496]{0}', space=vmem, size = 0x1a000, scoped, tag = 'input window, operand 0']
    #allocation3 [shape = 's32[2]{0}', space=sflag, size = 0x8, scoped, tag = 'scoped memory for tpu_custom_call.1']
    %8 = vsyncpa [#allocation3], 0
    %s9 = scalar_lea.sflag [#allocation3], 1
    %10 = vsyncpa %s9, 0
    loop: start=0, step=1, limit=6
    $region2: #{tpu_custom_call.1} parent=1 // loop_pre_header
      _
    $region3: #{tpu_custom_call.1} parent=1 // loop_header
      %s12 = sphi 0, %s16
      %p13 = scmp.ge.s32.totalorder %s12, 6
      %s22 = sphi 0, %s24
      %s25 = sphi 0, %s22
      %s26 = sphi 0, %s25
      %s42 = sphi 0, %s26
      %s46 = sphi 0, %s46
      %s48 = sphi 0, %s46
      %s49 = sphi 0, %s48
      %s63 = sphi 0, %s49
      %s67 = sphi 0, %s67
      %s69 = sphi 0, %s67
      %s70 = sphi 0, %s69
      %s84 = sphi 0, %s70
      %s90 = sphi 0, %s92
      %s93 = sphi 0, %s90
      %s94 = sphi 0, %s93
      %s110 = sphi 0, %s94
    $region4: #{tpu_custom_call.1} parent=1 // loop_header_branch
      %15 = sbr.rel (%p13) target = $region8
    $region5: #{tpu_custom_call.1} parent=1 // loop_body
      %s17 = ssub.s32 %s12, 1
      %s18 = ssub.s32 %s12, 2
      %s19 = sadd.s32 %s12, 1
      %s20 = ssub.s32 %s12, %s19
      %p21 = scmp.eq.s32.totalorder %s20, 0
      %s23 = sadd.s32 %s22, 1
      %s24 = scalar_select %p21, %s22, %s23
      %p27 = pneg %p21
      %p28 = scmp.eq.s32.totalorder %s12, 3
      %p29 = por %p27, %p28
      %p30 = scmp.ne.s32.totalorder %s22, %s25
      %p31 = scmp.eq.s32.totalorder %s12, 0
      %p32 = por %p30, %p31
      %p33 = scmp.ne.s32.totalorder %s22, %s25
      %p34 = scmp.eq.s32.totalorder %s17, 3
      %p35 = por %p33, %p34
      %p36 = scmp.ne.s32.totalorder %s25, %s26
      %p37 = scmp.eq.s32.totalorder %s17, 0
      %p38 = por %p36, %p37
      %p39 = scmp.ne.s32.totalorder %s25, %s26
      %p40 = scmp.eq.s32.totalorder %s18, 3
      %p41 = por %p39, %p40
      %p43 = scmp.ne.s32.totalorder %s26, %s42
      %p44 = scmp.eq.s32.totalorder %s18, 0
      %p45 = por %p43, %p44
      %s47 = sadd.s32 %s46, 1
      %p50 = scmp.eq.s32.totalorder %s12, 3
      %p51 = scmp.ne.s32.totalorder %s46, %s48
      %p52 = scmp.eq.s32.totalorder %s12, 0
      %p53 = por %p51, %p52
      %p54 = scmp.ne.s32.totalorder %s46, %s48
      %p55 = scmp.eq.s32.totalorder %s17, 3
      %p56 = por %p54, %p55
      %p57 = scmp.ne.s32.totalorder %s48, %s49
      %p58 = scmp.eq.s32.totalorder %s17, 0
      %p59 = por %p57, %p58
      %p60 = scmp.ne.s32.totalorder %s48, %s49
      %p61 = scmp.eq.s32.totalorder %s18, 3
      %p62 = por %p60, %p61
      %p64 = scmp.ne.s32.totalorder %s49, %s63
      %p65 = scmp.eq.s32.totalorder %s18, 0
      %p66 = por %p64, %p65
      %s68 = sadd.s32 %s67, 1
      %p71 = scmp.eq.s32.totalorder %s12, 3
      %p72 = scmp.ne.s32.totalorder %s67, %s69
      %p73 = scmp.eq.s32.totalorder %s12, 0
      %p74 = por %p72, %p73
      %p75 = scmp.ne.s32.totalorder %s67, %s69
      %p76 = scmp.eq.s32.totalorder %s17, 3
      %p77 = por %p75, %p76
      %p78 = scmp.ne.s32.totalorder %s69, %s70
      %p79 = scmp.eq.s32.totalorder %s17, 0
      %p80 = por %p78, %p79
      %p81 = scmp.ne.s32.totalorder %s69, %s70
      %p82 = scmp.eq.s32.totalorder %s18, 3
      %p83 = por %p81, %p82
      %p85 = scmp.ne.s32.totalorder %s70, %s84
      %p86 = scmp.eq.s32.totalorder %s18, 0
      %p87 = por %p85, %p86
      %s88 = ssub.s32 %s12, %s19
      %p89 = scmp.eq.s32.totalorder %s88, 0
      %s91 = sadd.s32 %s90, 1
      %s92 = scalar_select %p89, %s90, %s91
      %p95 = pneg %p89
      %p96 = scmp.eq.s32.totalorder %s12, 3
      %p97 = por %p95, %p96
      %p98 = scmp.ne.s32.totalorder %s90, %s93
      %p99 = scmp.eq.s32.totalorder %s12, 0
      %p100 = por %p98, %p99
      %p101 = scmp.ne.s32.totalorder %s90, %s93
      %p102 = scmp.eq.s32.totalorder %s17, 3
      %p103 = por %p101, %p102
      %p104 = scmp.ne.s32.totalorder %s93, %s94
      %p105 = scmp.eq.s32.totalorder %s17, 0
      %p106 = por %p104, %p105
      %p107 = scmp.ne.s32.totalorder %s93, %s94
      %p108 = scmp.eq.s32.totalorder %s18, 3
      %p109 = por %p107, %p108
      %p111 = scmp.ne.s32.totalorder %s94, %s110
      %p112 = scmp.eq.s32.totalorder %s18, 0
      %p113 = por %p111, %p112
      %p114 = scmp.le.s32.totalorder 1, %s12
      %p115 = scmp.lt.s32.totalorder %s12, 5
      %p116 = pnand %p114, %p115
      %p117 = pneg %p116
      // Predicated region
      $region9: #{tpu_custom_call.1} parent=5 // pred_check
        _
      $region10: #{tpu_custom_call.1} parent=5 // pred_check_branch
        %119 = sbr.rel (%p116) target = $region12
      $region11: #{tpu_custom_call.1} parent=5 // pred_region
        %s120 = ssub.s32 %s12, 1
        // Predicated region
        $region13: #{tpu_custom_call.1} parent=11 // pred_check
          %p121 = pneg %p59
        $region14: #{tpu_custom_call.1} parent=11 // pred_check_branch
          %123 = sbr.rel (%p121) target = $region16
        $region15: #{tpu_custom_call.1} parent=11 // pred_region
          _
        $region16: #{tpu_custom_call.1} parent=11 // pred_fallthru
          _
        // Predicated region
        $region17: #{tpu_custom_call.1} parent=11 // pred_check
          %p124 = pneg %p80
        $region18: #{tpu_custom_call.1} parent=11 // pred_check_branch
          %126 = sbr.rel (%p124) target = $region20
        $region19: #{tpu_custom_call.1} parent=11 // pred_region
          _
        $region20: #{tpu_custom_call.1} parent=11 // pred_fallthru
          _
      $region12: #{tpu_custom_call.1} parent=5 // pred_fallthru
        _
      %p127 = scmp.lt.s32.totalorder %s12, 4
      // Predicated region
      $region21: #{tpu_custom_call.1} parent=5 // pred_check
        %p128 = pneg %p127
      $region22: #{tpu_custom_call.1} parent=5 // pred_check_branch
        %130 = sbr.rel (%p128) target = $region24
      $region23: #{tpu_custom_call.1} parent=5 // pred_region
        // Predicated region
        $region25: #{tpu_custom_call.1} parent=23 // pred_check
          %p131 = pneg %p32
        $region26: #{tpu_custom_call.1} parent=23 // pred_check_branch
          %133 = sbr.rel (%p131) target = $region28
        $region27: #{tpu_custom_call.1} parent=23 // pred_region
          %s134 = sand.u32 %s22, 1
          %s135 = scalar_lea.sflag [#allocation3], %s134
          %s136 = sand.u32 %s22, 1
          %s137 = smul.addr %s136, 104
          %s138 = scalar_lea.vmem [#allocation2], %s137
          %s140 = ssub.s32 1664, 1664
          %141 = vsyncadd %s135, %s140
          %s142 = smul.addr %s12, 26
          %s143 = smul.addr %s142, 64
          %s144 = scalar_lea.hbm %s0, %s143
          %s145 = sshll.u32 %s138, 4
          %s146 = int_to_ptr.vmem [resolvable:$true] %s145
          %151 = dma.hbm_to_vmem [thread:$0]  %s144, 1664, %s146, %s135, 64, 64, 4
        $region28: #{tpu_custom_call.1} parent=23 // pred_fallthru
          _
      $region24: #{tpu_custom_call.1} parent=5 // pred_fallthru
        _
      %p152 = scmp.le.s32.totalorder 1, %s12
      %p153 = scmp.lt.s32.totalorder %s12, 5
      %p154 = pnand %p152, %p153
      %p155 = pneg %p154
      // Predicated region
      $region29: #{tpu_custom_call.1} parent=5 // pred_check
        _
      $region30: #{tpu_custom_call.1} parent=5 // pred_check_branch
        %157 = sbr.rel (%p154) target = $region32
      $region31: #{tpu_custom_call.1} parent=5 // pred_region
        %s158 = ssub.s32 %s12, 1
        %s159 = sand.u32 %s25, 1
        %s160 = scalar_lea.sflag [#allocation3], %s159
        %s161 = sand.u32 %s25, 1
        %s162 = smul.addr %s161, 104
        %s163 = scalar_lea.vmem [#allocation2], %s162
        // Predicated region
        $region33: #{tpu_custom_call.1} parent=31 // pred_check
          %p164 = pneg %p38
        $region34: #{tpu_custom_call.1} parent=31 // pred_check_branch
          %166 = sbr.rel (%p164) target = $region36
        $region35: #{tpu_custom_call.1} parent=31 // pred_region
          %167 = dma.done %s160, 1664
        $region36: #{tpu_custom_call.1} parent=31 // pred_fallthru
          _
        %s168 = sand.u32 %s25, 1
        %s169 = scalar_lea.sflag [#allocation3], %s168
        %s170 = sand.u32 %s25, 1
        %s171 = smul.addr %s170, 104
        %s172 = scalar_lea.vmem [#allocation2], %s171
        %p173 = pneg %p38
        %p174 = pneg %p35
        %p175 = pneg %p59
        %p176 = pneg %p56
        %p177 = pneg %p80
        %p178 = pneg %p77
        %p179 = pneg %p106
        %p180 = pneg %p103
        %p181 = scmp.lt.s32.totalorder %s17, 3
        %s182 = scalar_select %p181, %s17, 3
        %s183 = smul.addr %s182, 4
        %s184 = smul.addr %s183, 8
        %s185 = scalar_lea.vmem %s3, %s184
        %p186 = scmp.lt.s32.totalorder %s17, 3
        %s187 = scalar_select %p186, %s17, 3
        %s188 = smul.addr %s187, 4
        %s189 = smul.addr %s188, 8
        %s190 = scalar_lea.vmem %s3, %s189
        %v192 = vld [vmem:[%s163] sm:$0xf]
        %v193 = vld [vmem:[%s163 + $0x4] sm:$0xf]
        %v194 = vld [vmem:[%s163 + $0x8] sm:$0xf]
        %v195 = vld [vmem:[%s163 + $0xc] sm:$0xf]
        %v196 = vld [vmem:[%s163 + $0x10] sm:$0xf]
        %v197 = vld [vmem:[%s163 + $0x14] sm:$0xf]
        %v198 = vld [vmem:[%s163 + $0x18] sm:$0xf]
        %v199 = vld [vmem:[%s163 + $0x1c] sm:$0xf]
        %v200 = vld [vmem:[%s163 + $0x20] sm:$0xf]
        %v201 = vld [vmem:[%s163 + $0x24] sm:$0xf]
        %v202 = vld [vmem:[%s163 + $0x28] sm:$0xf]
        %v203 = vld [vmem:[%s163 + $0x2c] sm:$0xf]
        %v204 = vld [vmem:[%s163 + $0x30] sm:$0xf]
        %v205 = vld [vmem:[%s163 + $0x34] sm:$0xf]
        %v206 = vld [vmem:[%s163 + $0x38] sm:$0xf]
        %v207 = vld [vmem:[%s163 + $0x3c] sm:$0xf]
        %v208 = vld [vmem:[%s163 + $0x40] sm:$0xf]
        %v209 = vld [vmem:[%s163 + $0x44] sm:$0xf]
        %v210 = vld [vmem:[%s163 + $0x48] sm:$0xf]
        %v211 = vld [vmem:[%s163 + $0x4c] sm:$0xf]
        %v212 = vld [vmem:[%s163 + $0x50] sm:$0xf]
        %v213 = vld [vmem:[%s163 + $0x54] sm:$0xf]
        %v214 = vld [vmem:[%s163 + $0x58] sm:$0xf]
        %v215 = vld [vmem:[%s163 + $0x5c] sm:$0xf]
        %v216 = vld [vmem:[%s163 + $0x60] sm:$0xf]
        %v217 = vld [vmem:[%s163 + $0x64] sm:$0xf]
        %v236 = vunpack.c.l.b16 %v192
        %v237 = vunpack.c.l.b16 %v193
        %v238 = vunpack.c.l.b16 %v194
        %v239 = vunpack.c.l.b16 %v195
        %v240 = vunpack.c.l.b16 %v196
        %v241 = vunpack.c.l.b16 %v197
        %v242 = vunpack.c.l.b16 %v198
        %v243 = vunpack.c.l.b16 %v199
        %v244 = vunpack.c.l.b16 %v200
        %v245 = vunpack.c.l.b16 %v201
        %v246 = vunpack.c.l.b16 %v202
        %v247 = vunpack.c.l.b16 %v203
        %v248 = vunpack.c.l.b16 %v204
        %v249 = vunpack.c.l.b16 %v205
        %v250 = vunpack.c.l.b16 %v206
        %v251 = vunpack.c.l.b16 %v207
        %v252 = vunpack.c.l.b16 %v208
        %v253 = vunpack.c.l.b16 %v209
        %v254 = vpack.c.b16 %v237, %v236
        %v255 = vpack.c.b16 %v239, %v238
        %v256 = vpack.c.b16 %v241, %v240
        %v257 = vpack.c.b16 %v243, %v242
        %v258 = vpack.c.b16 %v245, %v244
        %v259 = vpack.c.b16 %v247, %v246
        %v260 = vpack.c.b16 %v249, %v248
        %v261 = vpack.c.b16 %v251, %v250
        %v262 = vpack.c.b16 %v253, %v252
        %v265 = vunpack.c.l.b16 %v210
        %v266 = vunpack.c.l.b16 %v211
        %v267 = vpack.c.b16 %v266, %v265
        %268 = vrot.lane.b32.xlu0 %v255, 16
        %v269 = vpop.permute.xlu0 %268
        %270 = vrot.lane.b32.xlu0 %v256, 16
        %v271 = vpop.permute.xlu0 %270
        %272 = vrot.lane.b32.xlu0 %v257, 16
        %v273 = vpop.permute.xlu0 %272
        %274 = vrot.lane.b32.xlu0 %v258, 16
        %v275 = vpop.permute.xlu0 %274
        %276 = vrot.lane.b32.xlu0 %v259, 16
        %v277 = vpop.permute.xlu0 %276
        %278 = vrot.lane.b32.xlu0 %v260, 16
        %v279 = vpop.permute.xlu0 %278
        %280 = vrot.lane.b32.xlu0 %v261, 16
        %v281 = vpop.permute.xlu0 %280
        %282 = vrot.lane.b32.xlu0 %v262, 16
        %v283 = vpop.permute.xlu0 %282
        %284 = vrot.lane.b32.xlu0 %v267, 16
        %v285 = vpop.permute.xlu0 %284
        %v288 = vunpack.c.l.b16 %v212
        %v289 = vunpack.c.l.b16 %v213
        %v290 = vpack.c.b16 %v289, %v288
        %291 = vrot.lane.b32.xlu0 %v256, 32
        %v292 = vpop.permute.xlu0 %291
        %293 = vrot.lane.b32.xlu0 %v257, 32
        %v294 = vpop.permute.xlu0 %293
        %295 = vrot.lane.b32.xlu0 %v258, 32
        %v296 = vpop.permute.xlu0 %295
        %297 = vrot.lane.b32.xlu0 %v259, 32
        %v298 = vpop.permute.xlu0 %297
        %299 = vrot.lane.b32.xlu0 %v260, 32
        %v300 = vpop.permute.xlu0 %299
        %301 = vrot.lane.b32.xlu0 %v261, 32
        %v302 = vpop.permute.xlu0 %301
        %303 = vrot.lane.b32.xlu0 %v262, 32
        %v304 = vpop.permute.xlu0 %303
        %305 = vrot.lane.b32.xlu0 %v267, 32
        %v306 = vpop.permute.xlu0 %305
        %307 = vrot.lane.b32.xlu0 %v290, 32
        %v308 = vpop.permute.xlu0 %307
        %v311 = vunpack.c.l.b16 %v214
        %v312 = vunpack.c.l.b16 %v215
        %v313 = vpack.c.b16 %v312, %v311
        %314 = vrot.lane.b32.xlu0 %v257, 48
        %v315 = vpop.permute.xlu0 %314
        %316 = vrot.lane.b32.xlu0 %v258, 48
        %v317 = vpop.permute.xlu0 %316
        %318 = vrot.lane.b32.xlu0 %v259, 48
        %v319 = vpop.permute.xlu0 %318
        %320 = vrot.lane.b32.xlu0 %v260, 48
        %v321 = vpop.permute.xlu0 %320
        %322 = vrot.lane.b32.xlu0 %v261, 48
        %v323 = vpop.permute.xlu0 %322
        %324 = vrot.lane.b32.xlu0 %v262, 48
        %v325 = vpop.permute.xlu0 %324
        %326 = vrot.lane.b32.xlu0 %v267, 48
        %v327 = vpop.permute.xlu0 %326
        %328 = vrot.lane.b32.xlu0 %v290, 48
        %v329 = vpop.permute.xlu0 %328
        %330 = vrot.lane.b32.xlu0 %v313, 48
        %v331 = vpop.permute.xlu0 %330
        %v334 = vunpack.c.l.b16 %v216
        %v335 = vunpack.c.l.b16 %v217
        %v336 = vpack.c.b16 %v335, %v334
        %337 = vrot.lane.b32.xlu0 %v258, 64
        %v338 = vpop.permute.xlu0 %337
        %339 = vrot.lane.b32.xlu0 %v259, 64
        %v340 = vpop.permute.xlu0 %339
        %341 = vrot.lane.b32.xlu0 %v260, 64
        %v342 = vpop.permute.xlu0 %341
        %343 = vrot.lane.b32.xlu0 %v261, 64
        %v344 = vpop.permute.xlu0 %343
        %345 = vrot.lane.b32.xlu0 %v262, 64
        %v346 = vpop.permute.xlu0 %345
        %347 = vrot.lane.b32.xlu0 %v267, 64
        %v348 = vpop.permute.xlu0 %347
        %349 = vrot.lane.b32.xlu0 %v290, 64
        %v350 = vpop.permute.xlu0 %349
        %351 = vrot.lane.b32.xlu0 %v313, 64
        %v352 = vpop.permute.xlu0 %351
        %353 = vrot.lane.b32.xlu0 %v336, 64
        %v354 = vpop.permute.xlu0 %353
        %vm355 = vcmask 130048
        %v358 = vsel %vm355, %v254, %v269
        %v361 = vsel %vm355, %v255, %v271
        %v364 = vsel %vm355, %v256, %v273
        %v367 = vsel %vm355, %v257, %v275
        %v370 = vsel %vm355, %v258, %v277
        %v373 = vsel %vm355, %v259, %v279
        %v376 = vsel %vm355, %v260, %v281
        %v379 = vsel %vm355, %v261, %v283
        %v382 = vsel %vm355, %v262, %v285
        %vm383 = vcmask 261120
        %v385 = vsel %vm383, %v358, %v292
        %v387 = vsel %vm383, %v361, %v294
        %v389 = vsel %vm383, %v364, %v296
        %v391 = vsel %vm383, %v367, %v298
        %v393 = vsel %vm383, %v370, %v300
        %v395 = vsel %vm383, %v373, %v302
        %v397 = vsel %vm383, %v376, %v304
        %v399 = vsel %vm383, %v379, %v306
        %v401 = vsel %vm383, %v382, %v308
        %vm402 = vcmask 392192
        %v404 = vsel %vm402, %v385, %v315
        %v406 = vsel %vm402, %v387, %v317
        %v408 = vsel %vm402, %v389, %v319
        %v410 = vsel %vm402, %v391, %v321
        %v412 = vsel %vm402, %v393, %v323
        %v414 = vsel %vm402, %v395, %v325
        %v416 = vsel %vm402, %v397, %v327
        %v418 = vsel %vm402, %v399, %v329
        %v420 = vsel %vm402, %v401, %v331
        %vm421 = vcmask 523264
        %v423 = vsel %vm421, %v404, %v338
        %v425 = vsel %vm421, %v406, %v340
        %v427 = vsel %vm421, %v408, %v342
        %v429 = vsel %vm421, %v410, %v344
        %v431 = vsel %vm421, %v412, %v346
        %v433 = vsel %vm421, %v414, %v348
        %v435 = vsel %vm421, %v416, %v350
        %v437 = vsel %vm421, %v418, %v352
        %v439 = vsel %vm421, %v420, %v354
        %v440 = vld [vmem:[%s1] sm:$0xf]
        %v441 = vld [vmem:[%s1 + $0x4] sm:$0xf]
        %v442 = vld [vmem:[%s1 + $0x8] sm:$0xf]
        %v443 = vld [vmem:[%s1 + $0xc] sm:$0xf]
        %v444 = vld [vmem:[%s1 + $0x10] sm:$0xf]
        %v445 = vld [vmem:[%s1 + $0x14] sm:$0xf]
        %v446 = vld [vmem:[%s1 + $0x18] sm:$0xf]
        %v447 = vld [vmem:[%s1 + $0x1c] sm:$0xf]
        %v448 = vld [vmem:[%s1 + $0x20] sm:$0xf]
        %v449 = vld [vmem:[%s1 + $0x24] sm:$0xf]
        %v450 = vld [vmem:[%s2] sm:$0x1]
        %v452 = vlaneseq
        %v453 = vshrl.u32 %v452, 7
        %v454 = vsub.s32 0, %v453
        %v455 = vrot.slane %v450, %v454
        %v467 = vunpack.c.l.b16 %v440
        %v468 = vunpack.c.l.b16 %v441
        %v469 = vunpack.c.l.b16 %v442
        %v470 = vunpack.c.l.b16 %v443
        %v471 = vunpack.c.l.b16 %v444
        %v472 = vunpack.c.l.b16 %v445
        %v473 = vunpack.c.l.b16 %v446
        %v474 = vunpack.c.l.b16 %v447
        %v475 = vunpack.c.l.b16 %v448
        %v476 = vunpack.c.l.b16 %v449
        %v477 = vpack.c.b16 %v468, %v467
        %v478 = vpack.c.b16 %v470, %v469
        %v479 = vpack.c.b16 %v472, %v471
        %v480 = vpack.c.b16 %v474, %v473
        %v481 = vpack.c.b16 %v476, %v475
        %vm487 = vcmask 654336
        %v488 = vsel %vm487, %v423, 0
        %v490 = vsel %vm487, %v425, 0
        %v492 = vsel %vm487, %v427, 0
        %v494 = vsel %vm487, %v429, 0
        %v496 = vsel %vm487, %v431, 0
        %v498 = vsel %vm487, %v433, 0
        %v500 = vsel %vm487, %v435, 0
        %v502 = vsel %vm487, %v437, 0
        %v504 = vsel %vm487, %v439, 0
        %506 = vmatprep.subr.bf16.mxu0 0
        %507 = vmatpush1.bf16.msra.mxu0 %v477
        %508 = vmatprep.subr.bf16.mxu0 0
        %509 = vmatpush1.bf16.msra.mxu0 %v478
        %510 = vmatprep.subr.bf16.mxu0 0
        %511 = vmatpush1.bf16.msra.mxu0 %v479
        %512 = vmatprep.subr.bf16.mxu0 0
        %513 = vmatpush1.bf16.msra.mxu0 %v480
        %514 = vmatprep.subr.bf16.mxu0 0
        %515 = vmatpush1.bf16.msra.mxu0 %v481
        %516 = vmatprep.subr.bf16.mxu0 0
        %517 = vmatpush1.bf16.msra.mxu0 0
        %518 = vmatprep.subr.bf16.mxu0 0
        %519 = vmatpush1.bf16.msra.mxu0 0
        %520 = vmatprep.subr.bf16.mxu0 0
        %521 = vmatpush1.bf16.msra.mxu0 0
        %522 = vmatprep.subr.bf16.mxu0 0
        %523 = vmatpush1.bf16.msra.mxu0 0
        %524 = vmatprep.subr.bf16.mxu0 0
        %525 = vmatpush1.bf16.msra.mxu0 0
        %526 = vmatprep.subr.bf16.mxu0 0
        %527 = vmatpush1.bf16.msra.mxu0 0
        %528 = vmatprep.subr.bf16.mxu0 0
        %529 = vmatpush1.bf16.msra.mxu0 0
        %530 = vmatprep.subr.bf16.mxu0 0
        %531 = vmatpush1.bf16.msra.mxu0 0
        %532 = vmatprep.subr.bf16.mxu0 0
        %533 = vmatpush1.bf16.msra.mxu0 0
        %534 = vmatprep.subr.bf16.mxu0 0
        %535 = vmatpush1.bf16.msra.mxu0 0
        %536 = vmatprep.subr.bf16.mxu0 0
        %537 = vmatpush1.bf16.msra.mxu0 0
        %538 = vmatprep.mubr.bf16.mxu0 0
        %539 = vmatmul.mubr.bf16.gmra.mrb[0].mxu0 %v488
        %v540 = vpop.f32.mrb[0].mxu0
        %v541 = vadd.f32 %v455, %v540
        %v542 = vpop.f32.mrb[0].mxu0
        %v543 = vpop.f32.mrb[0].mxu0
        %v544 = vadd.f32 %v455, %v543
        %v545 = vpop.f32.mrb[0].mxu0
        %546 = vmatprep.mubr.bf16.mxu0 0
        %547 = vmatmul.mubr.bf16.gmra.mrb[0].mxu0 %v490
        %v548 = vpop.f32.mrb[0].mxu0
        %v549 = vadd.f32 %v455, %v548
        %v550 = vpop.f32.mrb[0].mxu0
        %v551 = vpop.f32.mrb[0].mxu0
        %v552 = vadd.f32 %v455, %v551
        %v553 = vpop.f32.mrb[0].mxu0
        %554 = vmatprep.mubr.bf16.mxu0 0
        %555 = vmatmul.mubr.bf16.gmra.mrb[0].mxu0 %v492
        %v556 = vpop.f32.mrb[0].mxu0
        %v557 = vadd.f32 %v455, %v556
        %v558 = vpop.f32.mrb[0].mxu0
        %v559 = vpop.f32.mrb[0].mxu0
        %v560 = vadd.f32 %v455, %v559
        %v561 = vpop.f32.mrb[0].mxu0
        %562 = vmatprep.mubr.bf16.mxu0 0
        %563 = vmatmul.mubr.bf16.gmra.mrb[0].mxu0 %v494
        %v564 = vpop.f32.mrb[0].mxu0
        %v565 = vadd.f32 %v455, %v564
        %v566 = vpop.f32.mrb[0].mxu0
        %v567 = vpop.f32.mrb[0].mxu0
        %v568 = vadd.f32 %v455, %v567
        %v569 = vpop.f32.mrb[0].mxu0
        %570 = vmatprep.mubr.bf16.mxu0 0
        %571 = vmatmul.mubr.bf16.gmra.mrb[0].mxu0 %v496
        %v572 = vpop.f32.mrb[0].mxu0
        %v573 = vadd.f32 %v455, %v572
        %v574 = vpop.f32.mrb[0].mxu0
        %v575 = vpop.f32.mrb[0].mxu0
        %v576 = vadd.f32 %v455, %v575
        %v577 = vpop.f32.mrb[0].mxu0
        %578 = vmatprep.mubr.bf16.mxu0 0
        %579 = vmatmul.mubr.bf16.gmra.mrb[0].mxu0 %v498
        %v580 = vpop.f32.mrb[0].mxu0
        %v581 = vadd.f32 %v455, %v580
        %v582 = vpop.f32.mrb[0].mxu0
        %v583 = vpop.f32.mrb[0].mxu0
        %v584 = vadd.f32 %v455, %v583
        %v585 = vpop.f32.mrb[0].mxu0
        %586 = vmatprep.mubr.bf16.mxu0 0
        %587 = vmatmul.mubr.bf16.gmra.mrb[0].mxu0 %v500
        %v588 = vpop.f32.mrb[0].mxu0
        %v589 = vadd.f32 %v455, %v588
        %v590 = vpop.f32.mrb[0].mxu0
        %v591 = vpop.f32.mrb[0].mxu0
        %v592 = vadd.f32 %v455, %v591
        %v593 = vpop.f32.mrb[0].mxu0
        %594 = vmatprep.mubr.bf16.mxu0 0
        %595 = vmatmul.mubr.bf16.gmra.mrb[0].mxu0 %v502
        %v596 = vpop.f32.mrb[0].mxu0
        %v597 = vadd.f32 %v455, %v596
        %v598 = vpop.f32.mrb[0].mxu0
        %v599 = vpop.f32.mrb[0].mxu0
        %v600 = vadd.f32 %v455, %v599
        %v601 = vpop.f32.mrb[0].mxu0
        %602 = vmatprep.mubr.bf16.mxu0 0
        %603 = vmatmul.mubr.bf16.gmra.mrb[0].mxu0 %v504
        %v604 = vpop.f32.mrb[0].mxu0
        %v605 = vadd.f32 %v455, %v604
        %v606 = vpop.f32.mrb[0].mxu0
        %v607 = vpop.f32.mrb[0].mxu0
        %v608 = vadd.f32 %v455, %v607
        %v609 = vpop.f32.mrb[0].mxu0
        %610 = vdwg.mxu0
        %v611 = vmax.f32 %v541, 0.0
        %v612 = vmax.f32 %v544, 0.0
        %v613 = vmax.f32 %v549, 0.0
        %v614 = vmax.f32 %v552, 0.0
        %v615 = vmax.f32 %v557, 0.0
        %v616 = vmax.f32 %v560, 0.0
        %v617 = vmax.f32 %v565, 0.0
        %v618 = vmax.f32 %v568, 0.0
        %v619 = vmax.f32 %v573, 0.0
        %v620 = vmax.f32 %v576, 0.0
        %v621 = vmax.f32 %v581, 0.0
        %v622 = vmax.f32 %v584, 0.0
        %v623 = vmax.f32 %v589, 0.0
        %v624 = vmax.f32 %v592, 0.0
        %v625 = vmax.f32 %v597, 0.0
        %v626 = vmax.f32 %v600, 0.0
        %v627 = vmax.f32 %v605, 0.0
        %v628 = vmax.f32 %v608, 0.0
        %v629 = vmul.f32 %v611, %v611
        %v630 = vmul.f32 %v612, %v612
        %v631 = vmul.f32 %v613, %v613
        %v632 = vmul.f32 %v614, %v614
        %v633 = vmul.f32 %v615, %v615
        %v634 = vmul.f32 %v616, %v616
        %v635 = vmul.f32 %v617, %v617
        %v636 = vmul.f32 %v618, %v618
        %v637 = vmul.f32 %v619, %v619
        %v638 = vmul.f32 %v620, %v620
        %v639 = vmul.f32 %v621, %v621
        %v640 = vmul.f32 %v622, %v622
        %v641 = vmul.f32 %v623, %v623
        %v642 = vmul.f32 %v624, %v624
        %v643 = vmul.f32 %v625, %v625
        %v644 = vmul.f32 %v626, %v626
        %v645 = vmul.f32 %v627, %v627
        %v646 = vmul.f32 %v628, %v628
        %665 = vrot.lane.b32.xlu0 %v629, 1
        %v666 = vpop.permute.xlu0 %665
        %667 = vrot.lane.b32.xlu0 %v630, 1
        %v668 = vpop.permute.xlu0 %667
        %669 = vrot.lane.b32.xlu0 %v631, 1
        %v670 = vpop.permute.xlu0 %669
        %671 = vrot.lane.b32.xlu0 %v632, 1
        %v672 = vpop.permute.xlu0 %671
        %673 = vrot.lane.b32.xlu0 %v633, 1
        %v674 = vpop.permute.xlu0 %673
        %675 = vrot.lane.b32.xlu0 %v634, 1
        %v676 = vpop.permute.xlu0 %675
        %677 = vrot.lane.b32.xlu0 %v635, 1
        %v678 = vpop.permute.xlu0 %677
        %679 = vrot.lane.b32.xlu0 %v636, 1
        %v680 = vpop.permute.xlu0 %679
        %681 = vrot.lane.b32.xlu0 %v637, 1
        %v682 = vpop.permute.xlu0 %681
        %683 = vrot.lane.b32.xlu0 %v638, 1
        %v684 = vpop.permute.xlu0 %683
        %685 = vrot.lane.b32.xlu0 %v639, 1
        %v686 = vpop.permute.xlu0 %685
        %687 = vrot.lane.b32.xlu0 %v640, 1
        %v688 = vpop.permute.xlu0 %687
        %689 = vrot.lane.b32.xlu0 %v641, 1
        %v690 = vpop.permute.xlu0 %689
        %691 = vrot.lane.b32.xlu0 %v642, 1
        %v692 = vpop.permute.xlu0 %691
        %693 = vrot.lane.b32.xlu0 %v643, 1
        %v694 = vpop.permute.xlu0 %693
        %695 = vrot.lane.b32.xlu0 %v644, 1
        %v696 = vpop.permute.xlu0 %695
        %697 = vrot.lane.b32.xlu0 %v645, 1
        %v698 = vpop.permute.xlu0 %697
        %699 = vrot.lane.b32.xlu0 %v646, 1
        %v700 = vpop.permute.xlu0 %699
        %vm719 = vcmask 7168
        %v720 = vsel %vm719, 0.0, %v666
        %v721 = vsel %vm719, 0.0, %v668
        %v722 = vsel %vm719, 0.0, %v670
        %v723 = vsel %vm719, 0.0, %v672
        %v724 = vsel %vm719, 0.0, %v674
        %v725 = vsel %vm719, 0.0, %v676
        %v726 = vsel %vm719, 0.0, %v678
        %v727 = vsel %vm719, 0.0, %v680
        %v728 = vsel %vm719, 0.0, %v682
        %v729 = vsel %vm719, 0.0, %v684
        %v730 = vsel %vm719, 0.0, %v686
        %v731 = vsel %vm719, 0.0, %v688
        %v732 = vsel %vm719, 0.0, %v690
        %v733 = vsel %vm719, 0.0, %v692
        %v734 = vsel %vm719, 0.0, %v694
        %v735 = vsel %vm719, 0.0, %v696
        %v736 = vsel %vm719, 0.0, %v698
        %v737 = vsel %vm719, 0.0, %v700
        %v738 = vadd.f32 %v629, %v720
        %v739 = vadd.f32 %v630, %v721
        %v740 = vadd.f32 %v631, %v722
        %v741 = vadd.f32 %v632, %v723
        %v742 = vadd.f32 %v633, %v724
        %v743 = vadd.f32 %v634, %v725
        %v744 = vadd.f32 %v635, %v726
        %v745 = vadd.f32 %v636, %v727
        %v746 = vadd.f32 %v637, %v728
        %v747 = vadd.f32 %v638, %v729
        %v748 = vadd.f32 %v639, %v730
        %v749 = vadd.f32 %v640, %v731
        %v750 = vadd.f32 %v641, %v732
        %v751 = vadd.f32 %v642, %v733
        %v752 = vadd.f32 %v643, %v734
        %v753 = vadd.f32 %v644, %v735
        %v754 = vadd.f32 %v645, %v736
        %v755 = vadd.f32 %v646, %v737
        %756 = vrot.lane.b32.xlu0 %v629, 127
        %v757 = vpop.permute.xlu0 %756
        %758 = vrot.lane.b32.xlu0 %v630, 127
        %v759 = vpop.permute.xlu0 %758
        %760 = vrot.lane.b32.xlu0 %v631, 127
        %v761 = vpop.permute.xlu0 %760
        %762 = vrot.lane.b32.xlu0 %v632, 127
        %v763 = vpop.permute.xlu0 %762
        %764 = vrot.lane.b32.xlu0 %v633, 127
        %v765 = vpop.permute.xlu0 %764
        %766 = vrot.lane.b32.xlu0 %v634, 127
        %v767 = vpop.permute.xlu0 %766
        %768 = vrot.lane.b32.xlu0 %v635, 127
        %v769 = vpop.permute.xlu0 %768
        %770 = vrot.lane.b32.xlu0 %v636, 127
        %v771 = vpop.permute.xlu0 %770
        %772 = vrot.lane.b32.xlu0 %v637, 127
        %v773 = vpop.permute.xlu0 %772
        %774 = vrot.lane.b32.xlu0 %v638, 127
        %v775 = vpop.permute.xlu0 %774
        %776 = vrot.lane.b32.xlu0 %v639, 127
        %v777 = vpop.permute.xlu0 %776
        %778 = vrot.lane.b32.xlu0 %v640, 127
        %v779 = vpop.permute.xlu0 %778
        %780 = vrot.lane.b32.xlu0 %v641, 127
        %v781 = vpop.permute.xlu0 %780
        %782 = vrot.lane.b32.xlu0 %v642, 127
        %v783 = vpop.permute.xlu0 %782
        %784 = vrot.lane.b32.xlu0 %v643, 127
        %v785 = vpop.permute.xlu0 %784
        %786 = vrot.lane.b32.xlu0 %v644, 127
        %v787 = vpop.permute.xlu0 %786
        %788 = vrot.lane.b32.xlu0 %v645, 127
        %v789 = vpop.permute.xlu0 %788
        %790 = vrot.lane.b32.xlu0 %v646, 127
        %v791 = vpop.permute.xlu0 %790
        %vm810 = vcmask 515072
        %v811 = vsel %vm810, %v757, 0.0
        %v812 = vsel %vm810, %v759, 0.0
        %v813 = vsel %vm810, %v761, 0.0
        %v814 = vsel %vm810, %v763, 0.0
        %v815 = vsel %vm810, %v765, 0.0
        %v816 = vsel %vm810, %v767, 0.0
        %v817 = vsel %vm810, %v769, 0.0
        %v818 = vsel %vm810, %v771, 0.0
        %v819 = vsel %vm810, %v773, 0.0
        %v820 = vsel %vm810, %v775, 0.0
        %v821 = vsel %vm810, %v777, 0.0
        %v822 = vsel %vm810, %v779, 0.0
        %v823 = vsel %vm810, %v781, 0.0
        %v824 = vsel %vm810, %v783, 0.0
        %v825 = vsel %vm810, %v785, 0.0
        %v826 = vsel %vm810, %v787, 0.0
        %v827 = vsel %vm810, %v789, 0.0
        %v828 = vsel %vm810, %v791, 0.0
        %v829 = vadd.f32 %v738, %v811
        %v830 = vadd.f32 %v739, %v812
        %v831 = vadd.f32 %v740, %v813
        %v832 = vadd.f32 %v741, %v814
        %v833 = vadd.f32 %v742, %v815
        %v834 = vadd.f32 %v743, %v816
        %v835 = vadd.f32 %v744, %v817
        %v836 = vadd.f32 %v745, %v818
        %v837 = vadd.f32 %v746, %v819
        %v838 = vadd.f32 %v747, %v820
        %v839 = vadd.f32 %v748, %v821
        %v840 = vadd.f32 %v749, %v822
        %v841 = vadd.f32 %v750, %v823
        %v842 = vadd.f32 %v751, %v824
        %v843 = vadd.f32 %v752, %v825
        %v844 = vadd.f32 %v753, %v826
        %v845 = vadd.f32 %v754, %v827
        %v846 = vadd.f32 %v755, %v828
        %v847 = vmul.f32 %v829, 1.6666667e-05
        %v848 = vmul.f32 %v830, 1.6666667e-05
        %v849 = vmul.f32 %v831, 1.6666667e-05
        %v850 = vmul.f32 %v832, 1.6666667e-05
        %v851 = vmul.f32 %v833, 1.6666667e-05
        %v852 = vmul.f32 %v834, 1.6666667e-05
        %v853 = vmul.f32 %v835, 1.6666667e-05
        %v854 = vmul.f32 %v836, 1.6666667e-05
        %v855 = vmul.f32 %v837, 1.6666667e-05
        %v856 = vmul.f32 %v838, 1.6666667e-05
        %v857 = vmul.f32 %v839, 1.6666667e-05
        %v858 = vmul.f32 %v840, 1.6666667e-05
        %v859 = vmul.f32 %v841, 1.6666667e-05
        %v860 = vmul.f32 %v842, 1.6666667e-05
        %v861 = vmul.f32 %v843, 1.6666667e-05
        %v862 = vmul.f32 %v844, 1.6666667e-05
        %v863 = vmul.f32 %v845, 1.6666667e-05
        %v864 = vmul.f32 %v846, 1.6666667e-05
        %v865 = vadd.f32 %v847, 1.0
        %v866 = vadd.f32 %v848, 1.0
        %v867 = vadd.f32 %v849, 1.0
        %v868 = vadd.f32 %v850, 1.0
        %v869 = vadd.f32 %v851, 1.0
        %v870 = vadd.f32 %v852, 1.0
        %v871 = vadd.f32 %v853, 1.0
        %v872 = vadd.f32 %v854, 1.0
        %v873 = vadd.f32 %v855, 1.0
        %v874 = vadd.f32 %v856, 1.0
        %v875 = vadd.f32 %v857, 1.0
        %v876 = vadd.f32 %v858, 1.0
        %v877 = vadd.f32 %v859, 1.0
        %v878 = vadd.f32 %v860, 1.0
        %v879 = vadd.f32 %v861, 1.0
        %v880 = vadd.f32 %v862, 1.0
        %v881 = vadd.f32 %v863, 1.0
        %v882 = vadd.f32 %v864, 1.0
        %v883 = vrsqrt.pop %v865
        %v884 = vrsqrt.pop %v866
        %v885 = vrsqrt.pop %v867
        %v886 = vrsqrt.pop %v868
        %v887 = vrsqrt.pop %v869
        %v888 = vrsqrt.pop %v870
        %v889 = vrsqrt.pop %v871
        %v890 = vrsqrt.pop %v872
        %v891 = vrsqrt.pop %v873
        %v892 = vrsqrt.pop %v874
        %v893 = vrsqrt.pop %v875
        %v894 = vrsqrt.pop %v876
        %v895 = vrsqrt.pop %v877
        %v896 = vrsqrt.pop %v878
        %v897 = vrsqrt.pop %v879
        %v898 = vrsqrt.pop %v880
        %v899 = vrsqrt.pop %v881
        %v900 = vrsqrt.pop %v882
        %v901 = vrsqrt.pop %v883
        %v902 = vmul.f32 %v883, %v901
        %vm903 = vcmp.eq.f32.partialorder %v883, inf
        %v904 = vsel %vm903, %v883, %v902
        %vm905 = vcmp.eq.f32.partialorder %v883, 0.0
        %v906 = vand.u32 %v883, 2147483648
        %v907 = vsel %vm905, %v906, %v904
        %v908 = vrsqrt.pop %v884
        %v909 = vmul.f32 %v884, %v908
        %vm910 = vcmp.eq.f32.partialorder %v884, inf
        %v911 = vsel %vm910, %v884, %v909
        %vm912 = vcmp.eq.f32.partialorder %v884, 0.0
        %v913 = vand.u32 %v884, 2147483648
        %v914 = vsel %vm912, %v913, %v911
        %v915 = vrsqrt.pop %v885
        %v916 = vmul.f32 %v885, %v915
        %vm917 = vcmp.eq.f32.partialorder %v885, inf
        %v918 = vsel %vm917, %v885, %v916
        %vm919 = vcmp.eq.f32.partialorder %v885, 0.0
        %v920 = vand.u32 %v885, 2147483648
        %v921 = vsel %vm919, %v920, %v918
        %v922 = vrsqrt.pop %v886
        %v923 = vmul.f32 %v886, %v922
        %vm924 = vcmp.eq.f32.partialorder %v886, inf
        %v925 = vsel %vm924, %v886, %v923
        %vm926 = vcmp.eq.f32.partialorder %v886, 0.0
        %v927 = vand.u32 %v886, 2147483648
        %v928 = vsel %vm926, %v927, %v925
        %v929 = vrsqrt.pop %v887
        %v930 = vmul.f32 %v887, %v929
        %vm931 = vcmp.eq.f32.partialorder %v887, inf
        %v932 = vsel %vm931, %v887, %v930
        %vm933 = vcmp.eq.f32.partialorder %v887, 0.0
        %v934 = vand.u32 %v887, 2147483648
        %v935 = vsel %vm933, %v934, %v932
        %v936 = vrsqrt.pop %v888
        %v937 = vmul.f32 %v888, %v936
        %vm938 = vcmp.eq.f32.partialorder %v888, inf
        %v939 = vsel %vm938, %v888, %v937
        %vm940 = vcmp.eq.f32.partialorder %v888, 0.0
        %v941 = vand.u32 %v888, 2147483648
        %v942 = vsel %vm940, %v941, %v939
        %v943 = vrsqrt.pop %v889
        %v944 = vmul.f32 %v889, %v943
        %vm945 = vcmp.eq.f32.partialorder %v889, inf
        %v946 = vsel %vm945, %v889, %v944
        %vm947 = vcmp.eq.f32.partialorder %v889, 0.0
        %v948 = vand.u32 %v889, 2147483648
        %v949 = vsel %vm947, %v948, %v946
        %v950 = vrsqrt.pop %v890
        %v951 = vmul.f32 %v890, %v950
        %vm952 = vcmp.eq.f32.partialorder %v890, inf
        %v953 = vsel %vm952, %v890, %v951
        %vm954 = vcmp.eq.f32.partialorder %v890, 0.0
        %v955 = vand.u32 %v890, 2147483648
        %v956 = vsel %vm954, %v955, %v953
        %v957 = vrsqrt.pop %v891
        %v958 = vmul.f32 %v891, %v957
        %vm959 = vcmp.eq.f32.partialorder %v891, inf
        %v960 = vsel %vm959, %v891, %v958
        %vm961 = vcmp.eq.f32.partialorder %v891, 0.0
        %v962 = vand.u32 %v891, 2147483648
        %v963 = vsel %vm961, %v962, %v960
        %v964 = vrsqrt.pop %v892
        %v965 = vmul.f32 %v892, %v964
        %vm966 = vcmp.eq.f32.partialorder %v892, inf
        %v967 = vsel %vm966, %v892, %v965
        %vm968 = vcmp.eq.f32.partialorder %v892, 0.0
        %v969 = vand.u32 %v892, 2147483648
        %v970 = vsel %vm968, %v969, %v967
        %v971 = vrsqrt.pop %v893
        %v972 = vmul.f32 %v893, %v971
        %vm973 = vcmp.eq.f32.partialorder %v893, inf
        %v974 = vsel %vm973, %v893, %v972
        %vm975 = vcmp.eq.f32.partialorder %v893, 0.0
        %v976 = vand.u32 %v893, 2147483648
        %v977 = vsel %vm975, %v976, %v974
        %v978 = vrsqrt.pop %v894
        %v979 = vmul.f32 %v894, %v978
        %vm980 = vcmp.eq.f32.partialorder %v894, inf
        %v981 = vsel %vm980, %v894, %v979
        %vm982 = vcmp.eq.f32.partialorder %v894, 0.0
        %v983 = vand.u32 %v894, 2147483648
        %v984 = vsel %vm982, %v983, %v981
        %v985 = vrsqrt.pop %v895
        %v986 = vmul.f32 %v895, %v985
        %vm987 = vcmp.eq.f32.partialorder %v895, inf
        %v988 = vsel %vm987, %v895, %v986
        %vm989 = vcmp.eq.f32.partialorder %v895, 0.0
        %v990 = vand.u32 %v895, 2147483648
        %v991 = vsel %vm989, %v990, %v988
        %v992 = vrsqrt.pop %v896
        %v993 = vmul.f32 %v896, %v992
        %vm994 = vcmp.eq.f32.partialorder %v896, inf
        %v995 = vsel %vm994, %v896, %v993
        %vm996 = vcmp.eq.f32.partialorder %v896, 0.0
        %v997 = vand.u32 %v896, 2147483648
        %v998 = vsel %vm996, %v997, %v995
        %v999 = vrsqrt.pop %v897
        %v1000 = vmul.f32 %v897, %v999
        %vm1001 = vcmp.eq.f32.partialorder %v897, inf
        %v1002 = vsel %vm1001, %v897, %v1000
        %vm1003 = vcmp.eq.f32.partialorder %v897, 0.0
        %v1004 = vand.u32 %v897, 2147483648
        %v1005 = vsel %vm1003, %v1004, %v1002
        %v1006 = vrsqrt.pop %v898
        %v1007 = vmul.f32 %v898, %v1006
        %vm1008 = vcmp.eq.f32.partialorder %v898, inf
        %v1009 = vsel %vm1008, %v898, %v1007
        %vm1010 = vcmp.eq.f32.partialorder %v898, 0.0
        %v1011 = vand.u32 %v898, 2147483648
        %v1012 = vsel %vm1010, %v1011, %v1009
        %v1013 = vrsqrt.pop %v899
        %v1014 = vmul.f32 %v899, %v1013
        %vm1015 = vcmp.eq.f32.partialorder %v899, inf
        %v1016 = vsel %vm1015, %v899, %v1014
        %vm1017 = vcmp.eq.f32.partialorder %v899, 0.0
        %v1018 = vand.u32 %v899, 2147483648
        %v1019 = vsel %vm1017, %v1018, %v1016
        %v1020 = vrsqrt.pop %v900
        %v1021 = vmul.f32 %v900, %v1020
        %vm1022 = vcmp.eq.f32.partialorder %v900, inf
        %v1023 = vsel %vm1022, %v900, %v1021
        %vm1024 = vcmp.eq.f32.partialorder %v900, 0.0
        %v1025 = vand.u32 %v900, 2147483648
        %v1026 = vsel %vm1024, %v1025, %v1023
        %v1027 = vmul.f32 %v883, %v907
        %v1028 = vmul.f32 %v884, %v914
        %v1029 = vmul.f32 %v885, %v921
        %v1030 = vmul.f32 %v886, %v928
        %v1031 = vmul.f32 %v887, %v935
        %v1032 = vmul.f32 %v888, %v942
        %v1033 = vmul.f32 %v889, %v949
        %v1034 = vmul.f32 %v890, %v956
        %v1035 = vmul.f32 %v891, %v963
        %v1036 = vmul.f32 %v892, %v970
        %v1037 = vmul.f32 %v893, %v977
        %v1038 = vmul.f32 %v894, %v984
        %v1039 = vmul.f32 %v895, %v991
        %v1040 = vmul.f32 %v896, %v998
        %v1041 = vmul.f32 %v897, %v1005
        %v1042 = vmul.f32 %v898, %v1012
        %v1043 = vmul.f32 %v899, %v1019
        %v1044 = vmul.f32 %v900, %v1026
        %v1045 = vmul.f32 %v611, %v1027
        %v1046 = vmul.f32 %v612, %v1028
        %v1047 = vmul.f32 %v613, %v1029
        %v1048 = vmul.f32 %v614, %v1030
        %v1049 = vmul.f32 %v615, %v1031
        %v1050 = vmul.f32 %v616, %v1032
        %v1051 = vmul.f32 %v617, %v1033
        %v1052 = vmul.f32 %v618, %v1034
        %v1053 = vmul.f32 %v619, %v1035
        %v1054 = vmul.f32 %v620, %v1036
        %v1055 = vmul.f32 %v621, %v1037
        %v1056 = vmul.f32 %v622, %v1038
        %v1057 = vmul.f32 %v623, %v1039
        %v1058 = vmul.f32 %v624, %v1040
        %v1059 = vmul.f32 %v625, %v1041
        %v1060 = vmul.f32 %v626, %v1042
        %v1061 = vmul.f32 %v627, %v1043
        %v1062 = vmul.f32 %v628, %v1044
        %v1063 = vmax.f32 %v1045, %v1047
        %v1064 = vmax.f32 %v1046, %v1048
        %v1065 = vmax.f32 %v1049, %v1051
        %v1066 = vmax.f32 %v1050, %v1052
        %v1067 = vmax.f32 %v1053, %v1055
        %v1068 = vmax.f32 %v1054, %v1056
        %v1069 = vmax.f32 %v1057, %v1059
        %v1070 = vmax.f32 %v1058, %v1060
        %v1071 = vmax.f32 %v1063, %v1049
        %v1072 = vmax.f32 %v1064, %v1050
        %v1073 = vmax.f32 %v1065, %v1053
        %v1074 = vmax.f32 %v1066, %v1054
        %v1075 = vmax.f32 %v1067, %v1057
        %v1076 = vmax.f32 %v1068, %v1058
        %v1077 = vmax.f32 %v1069, %v1061
        %v1078 = vmax.f32 %v1070, %v1062
        %v1079 = vmax.f32 %v1071, %v1072
        %v1080 = vmax.f32 %v1073, %v1074
        %v1081 = vmax.f32 %v1075, %v1076
        %v1082 = vmax.f32 %v1077, %v1078
        %v1087 = vrot.slane %v1071, 1
        %v1088 = vrot.slane %v1073, 1
        %v1089 = vrot.slane %v1075, 1
        %v1090 = vrot.slane %v1077, 1
        %v1095 = vmax.f32 %v1079, %v1087
        %v1096 = vmax.f32 %v1080, %v1088
        %v1097 = vmax.f32 %v1081, %v1089
        %v1098 = vmax.f32 %v1082, %v1090
        %vm1099 = vcmask 522240
        %1100 = vst.msk [vmem:[%s190] sm:$0x7f] %vm1099, %v1095
        %1101 = vst.msk [vmem:[%s190 + $0x8] sm:$0x7f] %vm1099, %v1096
        %1102 = vst.msk [vmem:[%s190 + $0x10] sm:$0x7f] %vm1099, %v1097
        %1103 = vst.msk [vmem:[%s190 + $0x18] sm:$0x7f] %vm1099, %v1098
        %p1104 = scmp.lt.s32.totalorder %s17, 3
        %s1105 = scalar_select %p1104, %s17, 3
        %s1106 = smul.addr %s1105, 4
        %s1107 = smul.addr %s1106, 8
        %s1108 = scalar_lea.vmem %s3, %s1107
        // Predicated region
        $region37: #{tpu_custom_call.1} parent=31 // pred_check
          %p1109 = pneg %p103
        $region38: #{tpu_custom_call.1} parent=31 // pred_check_branch
          %1111 = sbr.rel (%p1109) target = $region40
        $region39: #{tpu_custom_call.1} parent=31 // pred_region
          _
        $region40: #{tpu_custom_call.1} parent=31 // pred_fallthru
          _
      $region32: #{tpu_custom_call.1} parent=5 // pred_fallthru
        _
      %p1112 = scmp.le.s32.totalorder 2, %s12
      // Predicated region
      $region41: #{tpu_custom_call.1} parent=5 // pred_check
        %p1113 = pneg %p1112
      $region42: #{tpu_custom_call.1} parent=5 // pred_check_branch
        %1115 = sbr.rel (%p1113) target = $region44
      $region43: #{tpu_custom_call.1} parent=5 // pred_region
        %s1116 = ssub.s32 %s12, 2
        // Predicated region
        $region45: #{tpu_custom_call.1} parent=43 // pred_check
          %p1117 = pneg %p109
        $region46: #{tpu_custom_call.1} parent=43 // pred_check_branch
          %1119 = sbr.rel (%p1117) target = $region48
        $region47: #{tpu_custom_call.1} parent=43 // pred_region
          %p1120 = scmp.lt.s32.totalorder %s18, 3
          %s1121 = scalar_select %p1120, %s18, 3
          %s1122 = smul.addr %s1121, 4
          %s1123 = smul.addr %s1122, 8
          %s1124 = scalar_lea.vmem %s3, %s1123
        $region48: #{tpu_custom_call.1} parent=43 // pred_fallthru
          _
      $region44: #{tpu_custom_call.1} parent=5 // pred_fallthru
        _
    $region6: #{tpu_custom_call.1} parent=1 // loop_footer
      %s16 = sadd.s32 1, %s12
    $region7: #{tpu_custom_call.1} parent=1 // loop_footer_branch
      %11 = sbr.rel target = $region3
    $region8: #{tpu_custom_call.1} parent=1 // loop_exit
      _
    %1125 = vsyncpa [#allocation3], 1
    %s1126 = scalar_lea.sflag [#allocation3], 1
    %1127 = vsyncpa %s1126, 1

</llo_original>
